<compile_context>
chip_gen: v6e
topology: v6e:2x2x1
jax: 0.10.0
libtpu: 0.0.40
codegen_flags: <defaults>
</compile_context>

<pallas_src>
import jax
import jax.numpy as jnp
from jax.experimental import pallas as pl
from jax.experimental.pallas import tpu as pltpu

_LANE = 128
_MAX_DMA_CHUNKS = 8            # enough to engage several DMA engines
_MIN_CHUNK_BYTES = 512 * 1024  # don't split below ~0.5 MiB per chunk


def identity(x):
    """Identity.forward(x) == x.

    The reference module returns its input unchanged; the optimal TPU
    "kernel" is therefore no kernel at all (zero HBM bytes moved).  Use
    identity_copy() only when a distinct output buffer is required.
    """
    return x


def _pick_lane_dense_2d(total):
    """Return (rows, lanes) with lanes a multiple of 128 and rows >= 8, or None."""
    for lane in (1024, 512, 256, _LANE):
        if total % lane == 0 and total // lane >= 8:
            return total // lane, lane
    return None


def _chunk_bounds(rows, row_bytes):
    """Static (start, size) row ranges: near-equal chunks, >= _MIN_CHUNK_BYTES each."""
    by_size = max(1, (rows * row_bytes) // _MIN_CHUNK_BYTES)
    n = max(1, min(_MAX_DMA_CHUNKS, rows, by_size))
    base, rem = divmod(rows, n)
    bounds, start = [], 0
    for i in range(n):
        size = base + (1 if i < rem else 0)
        bounds.append((start, size))
        start += size
    return tuple(bounds)


def _make_dma_copy_kernel(bounds):
    """Kernel that copies HBM->HBM in `len(bounds)` concurrent DMA chunks."""
    n_chunks = len(bounds)

    def kernel(x_ref, o_ref, sems):
        # x_ref / o_ref live in HBM (memory_space=pl.ANY): pure DMA copy, no
        # VMEM staging.  Start every chunk first, then wait on all of them so
        # the transfers overlap.
        for i, (start, size) in enumerate(bounds):
            pltpu.make_async_copy(
                x_ref.at[pl.ds(start, size)],
                o_ref.at[pl.ds(start, size)],
                sems.at[i],
            ).start()
        for i, (start, size) in enumerate(bounds):
            pltpu.make_async_copy(
                x_ref.at[pl.ds(start, size)],
                o_ref.at[pl.ds(start, size)],
                sems.at[i],
            ).wait()

    return kernel, n_chunks


def identity_copy(x):
    """Pallas kernel: returns a *distinct* HBM buffer with the same contents.

    Prefer identity(x) (zero-copy) whenever aliasing the input is acceptable.
    """
    if x.size == 0:
        return x

    orig_shape = x.shape
    dtype = x.dtype
    itemsize = jnp.dtype(dtype).itemsize
    total = x.size

    rc = _pick_lane_dense_2d(total)
    if rc is not None:
        # Free reshape of a contiguous array; gives a row axis along which
        # the copy is split into a few independent DMAs.
        rows, cols = rc
        x2 = x.reshape(rows, cols)
        bounds = _chunk_bounds(rows, cols * itemsize)
    else:
        # Awkward / tiny sizes: a DMA copy has no (8,128) layout constraint,
        # so copy the flattened array in a single shot (no padding needed).
        x2 = x if x.ndim == 1 else x.reshape(total)
        bounds = ((0, total),)

    kernel, n_chunks = _make_dma_copy_kernel(bounds)

    out = pl.pallas_call(
        kernel,
        out_shape=jax.ShapeDtypeStruct(x2.shape, dtype),
        in_specs=[pl.BlockSpec(memory_space=pl.ANY)],
        out_specs=pl.BlockSpec(memory_space=pl.ANY),
        scratch_shapes=[pltpu.SemaphoreType.DMA((n_chunks,))],
        # Accurate picture for XLA's scheduler: pure mem-bound op,
        # read + write of the whole array, zero compute.
        cost_estimate=pl.CostEstimate(
            flops=0, transcendentals=0, bytes_accessed=2 * total * itemsize
        ),
    )(x2)

    return out.reshape(orig_shape)


if __name__ == "__main__":
    key = jax.random.PRNGKey(0)
    # NCHW feature map consistent with the dense-net classifier.
    x = jax.random.normal(key, (2, 4, 16, 16), dtype=jnp.float32)

    # 1) Module semantics: forward(x) is x itself (zero bytes moved).
    y = identity(x)
    jax.block_until_ready(y)
    assert y.shape == x.shape and y.dtype == x.dtype
    assert bool(jnp.all(y == x)), "identity output mismatch"

    # 2) Pallas chunked HBM->HBM DMA copy (distinct output buffer).
    y_copy = identity_copy(x)
    jax.block_until_ready(y_copy)
    assert y_copy.shape == x.shape and y_copy.dtype == x.dtype
    assert bool(jnp.all(y_copy == x)), "identity_copy (f32) output mismatch"

    # Second dtype through the same DMA path (bf16, lane-dense slab 8x1024).
    xb = jax.random.normal(jax.random.PRNGKey(1), (8, 32, 32)).astype(jnp.bfloat16)
    yb = identity_copy(xb)
    jax.block_until_ready(yb)
    assert yb.shape == xb.shape and yb.dtype == xb.dtype
    assert bool(jnp.all(yb == xb)), "identity_copy (bf16) output mismatch"

    print("KERNEL_OK")
</pallas_src>

<mosaic_0001>
module attributes {stable_mosaic.version = 11 : i64} {
  func.func @kernel(%arg0: memref<8x256xf32, #tpu.memory_space<any>>, %arg1: memref<8x256xf32, #tpu.memory_space<any>>, %arg2: memref<1x!tpu.dma_semaphore, #tpu.memory_space<semaphore_mem>>) attributes {dimension_semantics = [], scalar_prefetch = 0 : i64, scratch_operands = 1 : i64, tpu.core_type = #tpu.core_type<tc>} {
    %c0_i32 = arith.constant 0 : i32
    %c0_i32_0 = arith.constant 0 : i32
    %c0_i32_1 = arith.constant 0 : i32
    %0 = tpu.memref_slice %arg0[%c0_i32_0, %c0_i32_1] : memref<8x256xf32, #tpu.memory_space<any>> -> memref<8x256xf32, #tpu.memory_space<any>>
    %c0_i32_2 = arith.constant 0 : i32
    %c0_i32_3 = arith.constant 0 : i32
    %1 = tpu.memref_slice %arg1[%c0_i32_2, %c0_i32_3] : memref<8x256xf32, #tpu.memory_space<any>> -> memref<8x256xf32, #tpu.memory_space<any>>
    %2 = tpu.memref_slice %arg2[%c0_i32] : memref<1x!tpu.dma_semaphore, #tpu.memory_space<semaphore_mem>> -> memref<1x!tpu.dma_semaphore, #tpu.memory_space<semaphore_mem>>
    %3 = tpu.memref_squeeze %2 : memref<1x!tpu.dma_semaphore, #tpu.memory_space<semaphore_mem>> -> memref<!tpu.dma_semaphore, #tpu.memory_space<semaphore_mem>>
    tpu.enqueue_dma source(%0 : memref<8x256xf32, #tpu.memory_space<any>>) target(%1 : memref<8x256xf32, #tpu.memory_space<any>>) target_semaphore(%3 : memref<!tpu.dma_semaphore, #tpu.memory_space<semaphore_mem>>)
    %c0_i32_4 = arith.constant 0 : i32
    %c0_i32_5 = arith.constant 0 : i32
    %c0_i32_6 = arith.constant 0 : i32
    %4 = tpu.memref_slice %arg0[%c0_i32_5, %c0_i32_6] : memref<8x256xf32, #tpu.memory_space<any>> -> memref<8x256xf32, #tpu.memory_space<any>>
    %c0_i32_7 = arith.constant 0 : i32
    %c0_i32_8 = arith.constant 0 : i32
    %5 = tpu.memref_slice %arg1[%c0_i32_7, %c0_i32_8] : memref<8x256xf32, #tpu.memory_space<any>> -> memref<8x256xf32, #tpu.memory_space<any>>
    %6 = tpu.memref_slice %arg2[%c0_i32_4] : memref<1x!tpu.dma_semaphore, #tpu.memory_space<semaphore_mem>> -> memref<1x!tpu.dma_semaphore, #tpu.memory_space<semaphore_mem>>
    %7 = tpu.memref_squeeze %6 : memref<1x!tpu.dma_semaphore, #tpu.memory_space<semaphore_mem>> -> memref<!tpu.dma_semaphore, #tpu.memory_space<semaphore_mem>>
    tpu.wait_dma2 semaphore(%7 : memref<!tpu.dma_semaphore, #tpu.memory_space<semaphore_mem>>) src(%4 : memref<8x256xf32, #tpu.memory_space<any>>) dst(%5 : memref<8x256xf32, #tpu.memory_space<any>>)
    return
  }
}

</mosaic_0001>

<llo_original>
// kernel: tpu_custom_call.1
$region0: #{tpu_custom_call.1}
  #allocation0 [shape = 'u32[]', space=smem, size = 0x4, offset = 0x4, fixed_abs, tag = 'smem constant byte address 0x4 - core index']
  #allocation1 [shape = 'u32[144,128]{1,0:T(1,128)}', space=vmem, size = 0x12000, scoped, tag = 'internal scratch']
  #allocation2 [shape = 's32[1]{0}', space=sflag, size = 0x4, scoped, tag = 'scratch operand']
  #allocation3 [shape = 's32[]', space=sflag, size = 0x4, offset = 0, fixed_abs, tag = 'sflag constant byte address 0x0 - dummy sync flag']
  #allocation4 [shape = 'u32[0]{0}', space=smem, size = 0, offset = 0, fixed_abs, tag = 'smem constant byte address 0x0 - null']
  %s0 = inlined_call_operand.hbm [shape: f32[8,256], index: 0, kind: input, shape index: {}]
  %s1 = inlined_call_operand.hbm [shape: f32[8,256], index: 1, kind: output, shape index: {}]
  %s2 = sld [smem:[#allocation0]]
  $region2: #{tpu_custom_call.1} parent=0
    _
  %s4 = ssub.s32 1, %s2
  %s5 = scalar_select 0, %s4, %s2
  %s7 = sshll.u32 1, 14
  %s8 = sxor.u32 4294967295, %s7
  %12 = dma.general %s0, 256, %s1, [#allocation2], 131072, [#allocation4], 0, 0
  %s13 = smul.u32 8, 1
  %s14 = smul.u32 %s13, 2
  %s15 = sshll.u32 %s14, 4
  %16 = dma.done [#allocation2], %s15
  %17 = vsyncmov [#allocation2]
  %s18 = vpop.sfrf %17
  %p19 = scmp.eq.s32.totalorder %s18, 0
  %p20 = pneg %p19
  %22 = shalt.err (%p20)

</llo_original>
